<compile_context>
chip_gen: v7x
topology: tpu7x:2x2x1
jax: 0.10.0
libtpu: 0.0.40
codegen_flags: <defaults>
</compile_context>

<pallas_src>
import functools

import jax
import jax.numpy as jnp
from jax.experimental import pallas as pl
from jax.experimental.pallas import tpu as pltpu


def _round_up(x, m):
    return ((x + m - 1) // m) * m


def _vmem_capacity_bytes():
    try:
        return int(pltpu.get_tpu_info().vmem_capacity_bytes)
    except Exception:
        return 64 * 1024 * 1024   # v7x per-TC capacity -> safe on every chip


# ---------------------------------------------------------------------------
# Pallas kernel 1: tiled global average pool over spatial axes
# ---------------------------------------------------------------------------
def _avgpool_kernel(inv_s, x_ref, o_ref, acc_ref):
    # x_ref: (TR, TS)   acc_ref: (TR, 1) f32 scratch   o_ref: (TR, 1) f32
    s = pl.program_id(1)

    @pl.when(s == 0)
    def _():
        acc_ref[...] = jnp.zeros_like(acc_ref)

    acc_ref[...] += jnp.sum(x_ref[...].astype(jnp.float32), axis=1,
                            keepdims=True)

    @pl.when(s == pl.num_programs(1) - 1)
    def _():
        o_ref[...] = acc_ref[...] * inv_s


def global_avg_pool(x, *, tile_rows=256, tile_s=2048):
    """x: (B, C, D, H, W) -> (B, C) fp32 mean over D*H*W."""
    B, C, D, H, W = x.shape
    S = D * H * W
    BC = B * C
    xf = x.reshape(BC, S)
    TR = min(tile_rows, _round_up(BC, 8))
    TS = min(tile_s, _round_up(S, 128))
    BC_p = _round_up(BC, TR)
    Sp = _round_up(S, TS)
    if (BC_p, Sp) != (BC, S):
        xf = jnp.pad(xf, ((0, BC_p - BC), (0, Sp - S)))  # zeros keep the sum
    out = pl.pallas_call(
        functools.partial(_avgpool_kernel, 1.0 / S),
        out_shape=jax.ShapeDtypeStruct((BC_p, 1), jnp.float32),
        grid=(BC_p // TR, Sp // TS),
        in_specs=[pl.BlockSpec((TR, TS), lambda r, s: (r, s))],
        out_specs=pl.BlockSpec((TR, 1), lambda r, s: (r, 0)),
        scratch_shapes=[pltpu.VMEM((TR, 1), jnp.float32)],
        compiler_params=pltpu.CompilerParams(
            dimension_semantics=("parallel", "arbitrary")),
    )(xf)
    return out[:BC, 0].reshape(B, C)


# ---------------------------------------------------------------------------
# Pallas kernel 2: dynamic-weight aggregation with all attentions folded in
# ---------------------------------------------------------------------------
def _aggregate_kernel(kernel_num, w_ref, ka_ref, sc_ref, fa_ref, o_ref):
    # w_ref : (KN, TC, TK)  candidate weights (shared across batch, resident)
    # ka_ref: (B, KN)       kernel attention, SMEM scalars
    # sc_ref: (1, 1, TK)    channel (x) spatial attention for this batch
    # fa_ref: (1, TC, 1)    filter attention for this batch
    # o_ref : (1, TC, TK)   effective weight for this batch
    b = pl.program_id(2)
    agg = w_ref[0].astype(jnp.float32) * ka_ref[b, 0]
    for n in range(1, kernel_num):                 # KN is small -> unrolled
        agg = agg + w_ref[n].astype(jnp.float32) * ka_ref[b, n]
    agg = agg * sc_ref[0].astype(jnp.float32) * fa_ref[0].astype(jnp.float32)
    o_ref[0] = agg.astype(o_ref.dtype)


def aggregate_weights_pallas(w_flat_p, kernel_att, scale_p, fa_p, *,
                             kernel_num, tc, tk, out_dtype):
    KN, Cout_p, CK_p = w_flat_p.shape
    B = kernel_att.shape[0]
    cap = _vmem_capacity_bytes()
    need = (2 * KN * tc * tk * jnp.dtype(w_flat_p.dtype).itemsize
            + 2 * tc * tk * jnp.dtype(out_dtype).itemsize
            + 2 * (tk + tc) * 4 + (2 << 20))
    vmem_limit = int(min(cap * 3 // 4, max(4 << 20, need)))
    kernel = functools.partial(_aggregate_kernel, kernel_num)
    return pl.pallas_call(
        kernel,
        out_shape=jax.ShapeDtypeStruct((B, Cout_p, CK_p), out_dtype),
        # Batch is the innermost (fastest-varying) grid axis: the candidate
        # weight block index is constant across consecutive steps, so Pallas
        # skips the refetch and the full weight tensor is read from HBM once.
        grid=(Cout_p // tc, CK_p // tk, B),
        in_specs=[
            pl.BlockSpec((KN, tc, tk), lambda co, ck, b: (0, co, ck)),
            pl.BlockSpec(memory_space=pltpu.MemorySpace.SMEM),   # kernel_att
            pl.BlockSpec((1, 1, tk), lambda co, ck, b: (b, 0, ck)),
            pl.BlockSpec((1, tc, 1), lambda co, ck, b: (b, co, 0)),
        ],
        out_specs=pl.BlockSpec((1, tc, tk), lambda co, ck, b: (b, co, ck)),
        compiler_params=pltpu.CompilerParams(
            dimension_semantics=("parallel", "parallel", "arbitrary"),
            vmem_limit_bytes=vmem_limit),
    )(w_flat_p, kernel_att.astype(jnp.float32), scale_p, fa_p)


# ---------------------------------------------------------------------------
# Pallas kernel 3: tiled batched GEMM  out[b] = W_eff[b] @ patches[b]
# ---------------------------------------------------------------------------
def _matmul_kernel(w_ref, p_ref, o_ref):
    # w_ref: (1, TC, TK) bf16   p_ref: (1, TK, TL) bf16   o_ref: (1, TC, TL) f32
    # o_ref is resident across the contraction axis -> it IS the accumulator.
    k = pl.program_id(3)

    @pl.when(k == 0)
    def _():
        o_ref[...] = jnp.zeros_like(o_ref)

    o_ref[...] += jnp.dot(w_ref[0], p_ref[0],
                          preferred_element_type=jnp.float32)[None]


def odconv_matmul_pallas(w_eff_p, patches_p, *, tc, tl, tk):
    B, Cout_p, CK_p = w_eff_p.shape
    _, _, L_p = patches_p.shape
    in_item = jnp.dtype(patches_p.dtype).itemsize
    cap = _vmem_capacity_bytes()
    # double-buffered bf16 operands + double-buffered f32 output block + margin
    need = 2 * (tc * tk + tk * tl) * in_item + 2 * tc * tl * 4 + (2 << 20)
    vmem_limit = int(min(cap * 3 // 4, max(4 << 20, need)))
    return pl.pallas_call(
        _matmul_kernel,
        out_shape=jax.ShapeDtypeStruct((B, Cout_p, L_p), jnp.float32),
        grid=(B, Cout_p // tc, L_p // tl, CK_p // tk),
        in_specs=[
            pl.BlockSpec((1, tc, tk), lambda b, co, l, k: (b, co, k)),
            pl.BlockSpec((1, tk, tl), lambda b, co, l, k: (b, k, l)),
        ],
        out_specs=pl.BlockSpec((1, tc, tl), lambda b, co, l, k: (b, co, l)),
        compiler_params=pltpu.CompilerParams(
            dimension_semantics=("parallel", "parallel", "parallel",
                                 "arbitrary"),
            vmem_limit_bytes=vmem_limit),
    )(w_eff_p, patches_p)


# ---------------------------------------------------------------------------
# Plain-JAX glue: im2col, tiny attention FCs, GroupNorm, parameter init
# ---------------------------------------------------------------------------
def im2col_3d(x, k, stride, padding, dilation):
    B, C, D, H, W = x.shape
    xp = jnp.pad(x, ((0, 0), (0, 0),
                     (padding, padding), (padding, padding), (padding, padding)))
    Do = (D + 2 * padding - dilation * (k - 1) - 1) // stride + 1
    Ho = (H + 2 * padding - dilation * (k - 1) - 1) // stride + 1
    Wo = (W + 2 * padding - dilation * (k - 1) - 1) // stride + 1
    cols = []
    for kd in range(k):
        for kh in range(k):
            for kw in range(k):
                d0, h0, w0 = kd * dilation, kh * dilation, kw * dilation
                sl = xp[:, :,
                        d0:d0 + stride * (Do - 1) + 1:stride,
                        h0:h0 + stride * (Ho - 1) + 1:stride,
                        w0:w0 + stride * (Wo - 1) + 1:stride]
                cols.append(sl)                                 # (B,C,Do,Ho,Wo)
    patches = jnp.stack(cols, axis=2)                           # (B,C,k^3,Do,Ho,Wo)
    return patches.reshape(B, C * k ** 3, Do * Ho * Wo), (Do, Ho, Wo)


def attention_from_pooled(pooled, p, temperature=1.0):
    """pooled: (B, Cin). Returns (channel, filter, spatial, kernel) attentions."""
    B = pooled.shape[0]
    h = pooled @ p['fc_w'].T                                    # (B, att), no bias
    att = h.shape[1]
    # GroupNorm(4, att), gamma=1, beta=0, eps=1e-5, biased variance
    hg = h.reshape(B, 4, att // 4)
    mean = jnp.mean(hg, axis=-1, keepdims=True)
    var = jnp.mean((hg - mean) ** 2, axis=-1, keepdims=True)
    hg = (hg - mean) / jnp.sqrt(var + 1e-5)
    h = hg.reshape(B, att) * p['gn_gamma'][None, :] + p['gn_beta'][None, :]
    h = jax.nn.relu(h)
    ca = jax.nn.sigmoid((h @ p['channel_fc_w'].T + p['channel_fc_b']) / temperature)
    fa = jax.nn.sigmoid((h @ p['filter_fc_w'].T + p['filter_fc_b']) / temperature)
    sa = jax.nn.sigmoid((h @ p['spatial_fc_w'].T + p['spatial_fc_b']) / temperature)
    ka = jax.nn.softmax((h @ p['kernel_fc_w'].T + p['kernel_fc_b']) / temperature,
                        axis=-1)
    return ca, fa, sa, ka


def init_params(key, in_planes, out_planes, kernel_size, kernel_num, groups=1,
                reduction=0.0625, min_channel=16):
    att = max(int(in_planes * reduction), min_channel)
    k = kernel_size
    keys = jax.random.split(key, 6)

    def kaiming(kk, shape, fan_out):
        return jax.random.normal(kk, shape, jnp.float32) * jnp.sqrt(2.0 / fan_out)

    return dict(
        fc_w=kaiming(keys[0], (att, in_planes), att),
        gn_gamma=jnp.ones((att,), jnp.float32),
        gn_beta=jnp.zeros((att,), jnp.float32),
        channel_fc_w=kaiming(keys[1], (in_planes, att), in_planes),
        channel_fc_b=jnp.zeros((in_planes,), jnp.float32),
        filter_fc_w=kaiming(keys[2], (out_planes, att), out_planes),
        filter_fc_b=jnp.zeros((out_planes,), jnp.float32),
        spatial_fc_w=kaiming(keys[3], (k ** 3, att), k ** 3),
        spatial_fc_b=jnp.zeros((k ** 3,), jnp.float32),
        kernel_fc_w=kaiming(keys[4], (kernel_num, att), kernel_num),
        kernel_fc_b=jnp.zeros((kernel_num,), jnp.float32),
        weight=kaiming(keys[5],
                       (kernel_num, out_planes, in_planes // groups, k, k, k),
                       out_planes * k ** 3),
    )


# ---------------------------------------------------------------------------
# ODConv3d forward (common path: kernel_size > 1 or kernel_num > 1)
# ---------------------------------------------------------------------------
def odconv3d_forward(x, p, *, kernel_size, stride=1, padding=0, dilation=1,
                     groups=1, temperature=1.0,
                     tile_cout=256, tile_l=2048, tile_ck=1024,
                     gemm_dtype=jnp.bfloat16):
    assert groups == 1  # TODO(synk): grouped/depthwise conv not implemented
    B, Cin, D, H, W = x.shape
    KN, Cout = p['weight'].shape[:2]
    k = kernel_size
    CK = Cin * k ** 3

    pooled = global_avg_pool(x)                                 # Pallas reduction
    ca, fa, sa, ka = attention_from_pooled(pooled, p, temperature)

    patches, (Do, Ho, Wo) = im2col_3d(x, k, stride, padding, dilation)
    L = Do * Ho * Wo

    # Tile sizes and lane-dense padded dims (TC=256 feeds the 256^2 MXU on
    # v6e/v7x; clamps to the actual size for small problems).
    TC = min(tile_cout, _round_up(Cout, 8))
    TL = min(tile_l, _round_up(L, 128))
    TK = min(tile_ck, _round_up(CK, 128))
    Cout_p = _round_up(Cout, TC)
    L_p = _round_up(L, TL)
    CK_p = _round_up(CK, TK)

    # bf16 GEMM operands (half the HBM traffic, native MXU path); f32 accum.
    patches_p = jnp.pad(patches,
                        ((0, 0), (0, CK_p - CK), (0, L_p - L))).astype(gemm_dtype)
    w_flat_p = jnp.pad(p['weight'].reshape(KN, Cout, CK),
                       ((0, 0), (0, Cout_p - Cout), (0, CK_p - CK)))

    # Channel attention folded into the weight's input-channel axis: exact only
    # because the conv uses zero padding (scaled zeros stay zero).
    scale = (ca[:, :, None] * sa[:, None, :]).reshape(B, 1, CK)
    scale_p = jnp.pad(scale, ((0, 0), (0, 0), (0, CK_p - CK)))
    fa_p = jnp.pad(fa, ((0, 0), (0, Cout_p - Cout))).reshape(B, Cout_p, 1)

    w_eff_p = aggregate_weights_pallas(w_flat_p, ka, scale_p, fa_p,
                                       kernel_num=KN, tc=TC, tk=TK,
                                       out_dtype=gemm_dtype)
    out_p = odconv_matmul_pallas(w_eff_p, patches_p, tc=TC, tl=TL, tk=TK)
    out = out_p[:, :Cout, :L].reshape(B, Cout, Do, Ho, Wo)
    return out.astype(x.dtype)


# ---------------------------------------------------------------------------
# Pure-JAX reference (mirrors the PyTorch _forward_impl_common exactly)
# ---------------------------------------------------------------------------
def reference_forward(x, p, *, kernel_size, stride=1, padding=0, dilation=1,
                      temperature=1.0):
    B, Cin, D, H, W = x.shape
    KN, Cout = p['weight'].shape[:2]
    k = kernel_size
    pooled = jnp.mean(x.reshape(B, Cin, -1), axis=-1)
    ca, fa, sa, ka = attention_from_pooled(pooled, p, temperature)
    xs = x * ca[:, :, None, None, None]
    agg = jnp.sum(sa.reshape(B, 1, 1, 1, k, k, k)
                  * ka.reshape(B, KN, 1, 1, 1, 1, 1)
                  * p['weight'][None], axis=1)                  # (B,Cout,Cin,k,k,k)
    outs = []
    for b in range(B):
        o = jax.lax.conv_general_dilated(
            xs[b:b + 1], agg[b],
            window_strides=(stride,) * 3,
            padding=[(padding, padding)] * 3,
            rhs_dilation=(dilation,) * 3,
            dimension_numbers=('NCDHW', 'OIDHW', 'NCDHW'))
        outs.append(o)
    out = jnp.concatenate(outs, axis=0)
    return out * fa[:, :, None, None, None]


if __name__ == "__main__":
    key = jax.random.PRNGKey(0)
    in_planes, out_planes, ksz, kernel_num = 8, 16, 3, 4
    stride, padding, dilation, groups = 1, 1, 1, 1
    B, D, H, W = 2, 4, 8, 8

    kp, kx = jax.random.split(key)
    params = init_params(kp, in_planes, out_planes, ksz, kernel_num, groups)
    x = jax.random.normal(kx, (B, in_planes, D, H, W), dtype=jnp.float32)

    out = odconv3d_forward(x, params, kernel_size=ksz, stride=stride,
                           padding=padding, dilation=dilation, groups=groups)
    out = jax.block_until_ready(out)

    ref = jax.block_until_ready(
        reference_forward(x, params, kernel_size=ksz, stride=stride,
                          padding=padding, dilation=dilation))

    assert out.shape == (B, out_planes, D, H, W), out.shape
    # bf16 GEMM operands -> slightly looser tolerance than a pure-f32 path.
    if bool(jnp.allclose(out, ref, rtol=3e-2, atol=3e-2)):
        print("KERNEL_OK")
    else:
        print("MISMATCH max_abs_err =", float(jnp.max(jnp.abs(out - ref))))
</pallas_src>

<mosaic_0001>
module attributes {stable_mosaic.version = 11 : i64} {
  func.func @_avgpool_kernel(%arg0: i32, %arg1: i32, %arg2: memref<16x256xf32, #tpu.memory_space<vmem>>, %arg3: memref<16x1xf32, #tpu.memory_space<vmem>>, %arg4: memref<16x1xf32, #tpu.memory_space<vmem>>) attributes {dimension_semantics = [#tpu.dimension_semantics<parallel>, #tpu.dimension_semantics<arbitrary>], iteration_bounds = array<i64: 1, 1>, scalar_prefetch = 0 : i64, scratch_operands = 1 : i64, tpu.core_type = #tpu.core_type<tc>, window_params = [{transform_indices = @transform_0, window_bounds = array<i64: 16, 256>}, {transform_indices = @transform_1, window_bounds = array<i64: 16, 1>}]} {
    %c0_i32 = arith.constant 0 : i32
    %0 = arith.cmpi eq, %arg1, %c0_i32 : i32
    %1 = arith.extui %0 : i1 to i32
    %c0_i32_0 = arith.constant 0 : i32
    %2 = arith.cmpi ne, %1, %c0_i32_0 : i32
    scf.if %2 {
      %cst_8 = arith.constant 0.000000e+00 : f32
      %12 = vector.broadcast %cst_8 : f32 to vector<16x1xf32>
      %c0_9 = arith.constant 0 : index
      %c0_10 = arith.constant 0 : index
      %13 = vector.load %arg4[%c0_9, %c0_10] : memref<16x1xf32, #tpu.memory_space<vmem>>, vector<16x1xf32>
      tpu.vector_store %arg4[%c0_9, %c0_10], %12 {strides = array<i32>} : memref<16x1xf32, #tpu.memory_space<vmem>>, vector<16x1xf32>,
    } else {
    }
    %c0 = arith.constant 0 : index
    %c0_1 = arith.constant 0 : index
    %3 = vector.load %arg4[%c0, %c0_1] : memref<16x1xf32, #tpu.memory_space<vmem>>, vector<16x1xf32>
    %c0_2 = arith.constant 0 : index
    %c0_3 = arith.constant 0 : index
    %4 = vector.load %arg2[%c0_2, %c0_3] : memref<16x256xf32, #tpu.memory_space<vmem>>, vector<16x256xf32>
    %cst = arith.constant dense<0.000000e+00> : vector<16xf32>
    %5 = vector.multi_reduction <add>, %4, %cst [1] : vector<16x256xf32> to vector<16xf32>
    %6 = vector.shape_cast %5 : vector<16xf32> to vector<16x1xf32>
    %7 = arith.addf %3, %6 : vector<16x1xf32>
    %c0_4 = arith.constant 0 : index
    %c0_5 = arith.constant 0 : index
    %8 = vector.load %arg4[%c0_4, %c0_5] : memref<16x1xf32, #tpu.memory_space<vmem>>, vector<16x1xf32>
    tpu.vector_store %arg4[%c0_4, %c0_5], %7 {strides = array<i32>} : memref<16x1xf32, #tpu.memory_space<vmem>>, vector<16x1xf32>,
    %c0_i32_6 = arith.constant 0 : i32
    %9 = arith.cmpi eq, %arg1, %c0_i32_6 : i32
    %10 = arith.extui %9 : i1 to i32
    %c0_i32_7 = arith.constant 0 : i32
    %11 = arith.cmpi ne, %10, %c0_i32_7 : i32
    scf.if %11 {
      %c0_8 = arith.constant 0 : index
      %c0_9 = arith.constant 0 : index
      %12 = vector.load %arg4[%c0_8, %c0_9] : memref<16x1xf32, #tpu.memory_space<vmem>>, vector<16x1xf32>
      %cst_10 = arith.constant 3.906250e-03 : f32
      %13 = vector.broadcast %cst_10 : f32 to vector<16x1xf32>
      %14 = arith.mulf %12, %13 : vector<16x1xf32>
      %c0_11 = arith.constant 0 : index
      %c0_12 = arith.constant 0 : index
      %15 = vector.load %arg3[%c0_11, %c0_12] : memref<16x1xf32, #tpu.memory_space<vmem>>, vector<16x1xf32>
      tpu.vector_store %arg3[%c0_11, %c0_12], %14 {strides = array<i32>} : memref<16x1xf32, #tpu.memory_space<vmem>>, vector<16x1xf32>,
    } else {
    }
    return
  }
  func.func @transform_0(%arg0: i32, %arg1: i32) -> (i32, i32) {
    %c0_i32 = arith.constant 0 : i32
    return %arg0, %arg1 : i32, i32
  }
  func.func @transform_1(%arg0: i32, %arg1: i32) -> (i32, i32) {
    %c0_i32 = arith.constant 0 : i32
    %c0_i32_0 = arith.constant 0 : i32
    return %arg0, %c0_i32 : i32, i32
  }
}

</mosaic_0001>

<llo_original>
// kernel: tpu_custom_call.1
$region0: #{tpu_custom_call.1}
  #allocation0 [shape = 'u32[]', space=smem, size = 0x4, offset = 0x4, fixed_abs, tag = 'smem constant byte address 0x4 - core index']
  #allocation1 [shape = 'u32[144,128]{1,0:T(1,128)}', space=vmem, size = 0x12000, scoped, tag = 'internal scratch']
  #allocation2 [shape = 'f32[16,1]{1,0:T(8,128)}', space=vmem, size = 0x2000, scoped, tag = 'scratch operand']
  %s0 = inlined_call_operand.hbm [shape: f32[16,256], index: 0, kind: input, shape index: {}]
  %s1 = inlined_call_operand.vmem [shape: f32[16,1], index: 1, kind: output, shape index: {}]
  %s2 = sld [smem:[#allocation0]]
  $region26: #{tpu_custom_call.1} parent=0
    _
  %s4 = ssub.s32 1, %s2
  %s5 = scalar_select 0, %s4, %s2
  $region1: #{tpu_custom_call.1} parent=0
    #allocation3 [shape = 'u8[16384]{0}', space=vmem, size = 0x4000, scoped, tag = 'input window, operand 0, single buffered']
    #allocation4 [shape = 's32[1]{0}', space=sflag, size = 0x4, scoped, tag = 'scoped memory for tpu_custom_call.1']
    %6 = vsyncpa [#allocation4], 0
    // Predicated region
    $region2: #{tpu_custom_call.1} parent=1 // pred_check
      _
    $region3: #{tpu_custom_call.1} parent=1 // pred_check_branch
      %8 = sbr.rel (0) target = $region5
    $region4: #{tpu_custom_call.1} parent=1 // pred_region
      %s10 = ssub.s32 512, 512
      %11 = vsyncadd [#allocation4], %s10
      %s12 = sshll.u32 [#allocation3], 4
      %s13 = int_to_ptr.vmem [resolvable:$true] %s12
      %18 = dma.hbm_to_vmem [thread:$0]  %s0, 512, %s13, [#allocation4], 256, 256, 16
    $region5: #{tpu_custom_call.1} parent=1 // pred_fallthru
      _
    // Predicated region
    $region6: #{tpu_custom_call.1} parent=1 // pred_check
      _
    $region7: #{tpu_custom_call.1} parent=1 // pred_check_branch
      %20 = sbr.rel (0) target = $region9
    $region8: #{tpu_custom_call.1} parent=1 // pred_region
      %21 = dma.done [#allocation4], 512
    $region9: #{tpu_custom_call.1} parent=1 // pred_fallthru
      _
    %p22 = scmp.eq.s32.totalorder 0, 0
    // Predicated region
    $region10: #{tpu_custom_call.1} parent=1 // pred_check
      %p23 = pneg %p22
    $region11: #{tpu_custom_call.1} parent=1 // pred_check_branch
      %25 = sbr.rel (%p23) target = $region13
    $region12: #{tpu_custom_call.1} parent=1 // pred_region
      %vm26 = vcmask 7168
      %27 = vst.msk [vmem:[#allocation2] sm:$0xff] %vm26, 0.0
      %28 = vst.msk [vmem:[#allocation2 + $0x8] sm:$0xff] %vm26, 0.0
    $region13: #{tpu_custom_call.1} parent=1 // pred_fallthru
      _
    %v29 = vld [vmem:[#allocation2] sm:$0xff]
    %v30 = vld [vmem:[#allocation2 + $0x8] sm:$0xff]
    %v31 = vld [vmem:[#allocation3] sm:$0xff]
    %v32 = vld [vmem:[#allocation3 + $0x8] sm:$0xff]
    %v33 = vld [vmem:[#allocation3 + $0x10] sm:$0xff]
    %v34 = vld [vmem:[#allocation3 + $0x18] sm:$0xff]
    %v35 = vadd.f32 %v31, %v32
    %36 = vadd.xlane.f32.xlu0 %v35
    %v37 = vpop.xlane.xlu0 %36
    %v38 = vadd.f32 %v33, %v34
    %39 = vadd.xlane.f32.xlu0 %v38
    %v40 = vpop.xlane.xlu0 %39
    %v41 = vadd.f32 %v29, %v37
    %v42 = vadd.f32 %v30, %v40
    %vm43 = vcmask 7168
    %44 = vst.msk [vmem:[#allocation2] sm:$0xff] %vm43, %v41
    %45 = vst.msk [vmem:[#allocation2 + $0x8] sm:$0xff] %vm43, %v42
    // Predicated region
    $region14: #{tpu_custom_call.1} parent=1 // pred_check
      %p46 = pneg %p22
    $region15: #{tpu_custom_call.1} parent=1 // pred_check_branch
      %48 = sbr.rel (%p46) target = $region17
    $region16: #{tpu_custom_call.1} parent=1 // pred_region
      %v49 = vld [vmem:[#allocation2] sm:$0xff]
      %v50 = vld [vmem:[#allocation2 + $0x8] sm:$0xff]
      %v51 = vmul.f32 %v49, 0.00390625
      %v52 = vmul.f32 %v50, 0.00390625
      %53 = vst.msk [vmem:[%s1] sm:$0xff] %vm43, %v51
      %54 = vst.msk [vmem:[%s1 + $0x8] sm:$0xff] %vm43, %v52
    $region17: #{tpu_custom_call.1} parent=1 // pred_fallthru
      _
    // Predicated region
    $region18: #{tpu_custom_call.1} parent=1 // pred_check
      _
    $region19: #{tpu_custom_call.1} parent=1 // pred_check_branch
      %56 = sbr.rel (0) target = $region21
    $region20: #{tpu_custom_call.1} parent=1 // pred_region
      _
    $region21: #{tpu_custom_call.1} parent=1 // pred_fallthru
      _
    // Predicated region
    $region22: #{tpu_custom_call.1} parent=1 // pred_check
      _
    $region23: #{tpu_custom_call.1} parent=1 // pred_check_branch
      %58 = sbr.rel (0) target = $region25
    $region24: #{tpu_custom_call.1} parent=1 // pred_region
      _
    $region25: #{tpu_custom_call.1} parent=1 // pred_fallthru
      _
    %59 = vsyncpa [#allocation4], 1

</llo_original>
